<compile_context>
chip_gen: v6e
topology: v6e:2x2x1
jax: 0.10.0
libtpu: 0.0.40
codegen_flags: <defaults>
</compile_context>

<pallas_src>
import jax
import jax.numpy as jnp
from jax import lax
from jax.experimental import pallas as pl
from jax.experimental.pallas import tpu as pltpu


def _round_up(x, m):
    return ((x + m - 1) // m) * m


# ----------------------------------------------------------------------------
# Tile selection (shared by the per-call wrapper and the one-off weight prep
# so the two always agree).
# ----------------------------------------------------------------------------
def _select_m_tile(M, tm):
    # bf16 activations pack 16 rows per vreg -> round the small-M case to 16.
    tm = min(tm, _round_up(M, 16))
    return tm, _round_up(M, tm)


def _select_nk_tiles(V, D, tn, tk):
    # N (vocab) tile: one block for small V (no wte padding, no output slice);
    # otherwise prefer a lane-dense tile (multiple of 128) that divides V.
    if V <= tn:
        tn = V
        Vp = V
    else:
        for cand in (tn, 1024, 768, 512, 384, 256, 128):
            if cand <= tn and V % cand == 0:
                tn = cand
                break
        Vp = _round_up(V, tn)
    # K (feature) tile must divide D exactly (never pad K).  tk == D collapses
    # the K grid to a single step (no accumulator needed).
    if tk is None:
        tk = D if D <= 2048 else 512
    tk = min(tk, D)
    if D % tk != 0:
        tk = D
    return tn, tk, Vp


def prepare_lm_head_weight(wte, *, tn=1024, tk=None):
    """One-off (init-time) prep of the tied embedding for the LM head kernel.

    Casts to bf16 and pads the vocab axis to the tile grid so the per-call
    wrapper never re-reads / re-writes the full embedding in HBM.
    """
    V, D = wte.shape
    _, _, Vp = _select_nk_tiles(V, D, tn, tk)
    w = wte.astype(jnp.bfloat16)
    if Vp != V:
        w = jnp.pad(w, ((0, Vp - V), (0, 0)))
    return w


# ----------------------------------------------------------------------------
# Kernel A: tied LM-head logits    lm_logits = lm_h[:, :-1, :] @ wte^T
# ----------------------------------------------------------------------------
def _lm_logits_kernel_single_k(x_ref, w_ref, o_ref):
    # Whole D fits in one K block: no accumulator, write the result directly.
    o_ref[...] = lax.dot_general(
        x_ref[...], w_ref[...],
        dimension_numbers=(((1,), (1,)), ((), ())),   # contract on D, no wte.T
        preferred_element_type=jnp.float32,
    ).astype(o_ref.dtype)


def _lm_logits_kernel_acc(x_ref, w_ref, o_ref, acc_ref):
    # NOTE: this accumulator pattern REQUIRES K to be the LAST grid axis
    # (marked "arbitrary") and the output BlockSpec to be K-invariant.
    @pl.when(pl.program_id(2) == 0)
    def _():
        acc_ref[...] = jnp.zeros_like(acc_ref)

    acc_ref[...] += lax.dot_general(
        x_ref[...], w_ref[...],
        dimension_numbers=(((1,), (1,)), ((), ())),
        preferred_element_type=jnp.float32,
    )

    @pl.when(pl.program_id(2) == pl.num_programs(2) - 1)
    def _():
        o_ref[...] = acc_ref[...].astype(o_ref.dtype)


def lm_logits_pallas(lm_h, wte_prepared, vocab_size, *, tm=512, tn=1024,
                     tk=None, out_dtype=jnp.bfloat16):
    """lm_h: (B, L, D) -> logits (B, L-1, V) against the tied embedding.

    `wte_prepared` should come from `prepare_lm_head_weight` (bf16, vocab
    padded once at init).  Large tiles (>=512) are the right choice on ALL
    generations (v5e included): the matmul's arithmetic intensity must exceed
    the HBM ridge, which 128/256-wide tiles do not.
    """
    B, L, D = lm_h.shape
    V = vocab_size
    M = B * (L - 1)

    tm, Mp = _select_m_tile(M, tm)
    tn, tk, Vp = _select_nk_tiles(V, D, tn, tk)
    assert D % tk == 0

    w = wte_prepared
    if w.shape != (Vp, D) or w.dtype != jnp.bfloat16:
        # Fallback path: costs one extra full-weight HBM round trip per call.
        w = wte_prepared[:V].astype(jnp.bfloat16)
        if Vp != V:
            w = jnp.pad(w, ((0, Vp - V), (0, 0)))

    # Drop the last token, collapse batch into M, cast for the MXU (single
    # fused XLA op); pad rows only when M is not a tile multiple.
    x = lm_h[:, :-1, :].astype(jnp.bfloat16).reshape(M, D)
    if Mp != M:
        x = jnp.pad(x, ((0, Mp - M), (0, 0)))

    mg, ng, kg = Mp // tm, Vp // tn, D // tk

    # Double-buffered VMEM footprint; only raise the scoped limit when needed
    # (sized against v7x's 64 MiB physical VMEM).
    out_isize = jnp.dtype(out_dtype).itemsize
    vmem_bytes = (2 * tm * tk * 2) + (2 * tn * tk * 2) + (2 * tm * tn * out_isize)
    if kg > 1:
        vmem_bytes += tm * tn * 4
    vmem_limit = None
    if vmem_bytes > 28 * 2**20:
        vmem_limit = min(int(vmem_bytes * 1.25), 64 * 2**20)

    if kg == 1:
        grid = (mg, ng)
        in_specs = [pl.BlockSpec((tm, tk), lambda i, j: (i, 0)),
                    pl.BlockSpec((tn, tk), lambda i, j: (j, 0))]
        out_specs = pl.BlockSpec((tm, tn), lambda i, j: (i, j))
        scratch = []
        kernel = _lm_logits_kernel_single_k
        sem = ("parallel", "parallel")
    else:
        grid = (mg, ng, kg)                      # K last + "arbitrary"
        in_specs = [pl.BlockSpec((tm, tk), lambda i, j, k: (i, k)),
                    pl.BlockSpec((tn, tk), lambda i, j, k: (j, k))]
        out_specs = pl.BlockSpec((tm, tn), lambda i, j, k: (i, j))
        scratch = [pltpu.VMEM((tm, tn), jnp.float32)]
        kernel = _lm_logits_kernel_acc
        sem = ("parallel", "parallel", "arbitrary")

    out = pl.pallas_call(
        kernel,
        out_shape=jax.ShapeDtypeStruct((Mp, Vp), out_dtype),
        grid_spec=pltpu.PrefetchScalarGridSpec(
            num_scalar_prefetch=0,
            grid=grid,
            in_specs=in_specs,
            out_specs=out_specs,
            scratch_shapes=scratch),
        compiler_params=pltpu.CompilerParams(
            dimension_semantics=sem, vmem_limit_bytes=vmem_limit),
    )(x, w)

    if (Mp, Vp) != (M, V):
        # Only exercised when M / V are not tile multiples (never for a real
        # vocab that is a multiple of the lane-dense tile).
        out = out[:M, :V]
    return out.reshape(B, L - 1, V)


# ----------------------------------------------------------------------------
# Kernel B: classifier-token pooling (row gather) + Linear(D, 1), ONE grid step
# ----------------------------------------------------------------------------
def _clf_pool_linear_kernel(rows_ref, w_ref, bias_ref, lmh_ref, out_ref,
                            rowbuf, sems):
    # rows_ref: SMEM (B,) int32   flat pooled-row indices (scalar-prefetched)
    # w_ref   : VMEM (1, D)       Linear(D, 1) weight
    # bias_ref: SMEM (1,)         Linear(D, 1) bias
    # lmh_ref : HBM  (B*L, D)     hidden states (memory_space=pl.ANY)
    # out_ref : VMEM (Br, 1)      per-choice logits (rows >= B are don't-care)
    # rowbuf  : VMEM (Br, D)      gathered pooled rows
    # sems    : DMA sems (Br,)
    nb = rows_ref.shape[0]

    # Gather ONLY the B pooled rows from HBM (B*D elements of DMA total,
    # instead of streaming the whole (B, L, D) tensor).
    @pl.loop(0, nb)
    def _(i):
        r = rows_ref[i]
        pltpu.make_async_copy(lmh_ref.at[pl.ds(r, 1), :],
                              rowbuf.at[pl.ds(i, 1), :],
                              sems.at[i]).start()

    @pl.loop(0, nb)
    def _(i):
        pltpu.make_async_copy(lmh_ref.at[pl.ds(0, 1), :],
                              rowbuf.at[pl.ds(i, 1), :],
                              sems.at[i]).wait()

    # Linear(D, 1) as a VPU multiply + lane reduce (no N=1 MXU matmul); one
    # store of the whole (tiny) output block, no per-row read-modify-write.
    x = rowbuf[...].astype(jnp.float32)
    w = w_ref[...].astype(jnp.float32)
    out_ref[...] = jnp.sum(x * w, axis=1, keepdims=True) + bias_ref[0]


def classifier_logits_pallas(tokens, lm_h, clf_w, clf_b, classifier_token):
    """tokens (B, L) int, lm_h (B, L, D) -> classifier logits (B,) float32."""
    B, L, D = lm_h.shape
    Br = _round_up(B, 8)

    # pool_idx: first position equal to the classifier token (argmax over a
    # 0/1 mask -> matches the torch reference incl. "absent -> position 0").
    pool_idx = jnp.argmax((tokens == classifier_token).astype(jnp.float32),
                          axis=1).astype(jnp.int32)
    rows = jnp.arange(B, dtype=jnp.int32) * L + pool_idx        # flat row ids

    lm_h_flat = lm_h.reshape(B * L, D)                          # metadata only

    out = pl.pallas_call(
        _clf_pool_linear_kernel,
        out_shape=jax.ShapeDtypeStruct((Br, 1), jnp.float32),
        grid_spec=pltpu.PrefetchScalarGridSpec(
            num_scalar_prefetch=1,                              # rows -> SMEM
            grid=(1,),                                          # single step
            in_specs=[
                pl.BlockSpec((1, D), lambda i, rows: (0, 0)),
                pl.BlockSpec(memory_space=pltpu.MemorySpace.SMEM),
                pl.BlockSpec(memory_space=pl.ANY),
            ],
            out_specs=pl.BlockSpec((Br, 1), lambda i, rows: (0, 0)),
            scratch_shapes=[
                pltpu.VMEM((Br, D), lm_h.dtype),
                pltpu.SemaphoreType.DMA((Br,)),
            ]),
        compiler_params=pltpu.CompilerParams(
            dimension_semantics=("arbitrary",)),
    )(rows, clf_w, clf_b, lm_h_flat)
    return out[:B, 0]


# ----------------------------------------------------------------------------
# Synthetic base language model (glue). The embedding lookup is a gather and
# stays in plain JAX.
# TODO(synk): the real base LM transformer blocks are out of scope; a tied
# embedding + tanh stub stands in for `base_language_model(h)`.
# ----------------------------------------------------------------------------
def base_lm_hidden(tokens, wte, wpe):
    emb = wte[tokens] + wpe[None, :, :]        # (B, L, D)
    return jnp.tanh(emb)


def classifier_forward(idx, params, classifier_token):
    """Mirrors Classifier.forward: idx (b, A, L) -> (lm_logits, clf_logits)."""
    b, A, L = idx.shape
    h = idx.reshape(b * A, L)                                      # (b a) l
    lm_h = base_lm_hidden(h, params["wte"], params["wpe"])         # (B, L, D)
    lm_logits = lm_logits_pallas(lm_h, params["wte_lm_head"],
                                 params["wte"].shape[0])           # (B, L-1, V)
    clf = classifier_logits_pallas(
        h, lm_h, params["clf_w"], params["clf_b"], classifier_token)  # (B,)
    return lm_logits, clf.reshape(b, A)


# ----------------------------------------------------------------------------
# Pure-JAX (f32) reference with the semantics of the PyTorch module.
# ----------------------------------------------------------------------------
def classifier_forward_ref(idx, params, classifier_token):
    b, A, L = idx.shape
    h = idx.reshape(b * A, L)
    lm_h = base_lm_hidden(h, params["wte"], params["wpe"])
    lm_logits = jnp.einsum("bld,vd->blv", lm_h[:, :-1, :], params["wte"])
    eq = (h == classifier_token).astype(jnp.float32)
    pool_idx = jnp.argmax(eq, axis=1)
    clf_h = lm_h[jnp.arange(h.shape[0]), pool_idx]                 # (B, D)
    clf = clf_h @ params["clf_w"].T + params["clf_b"]              # (B, 1)
    return lm_logits, clf.reshape(b, A)


if __name__ == "__main__":
    # Small, module-consistent shapes.
    b, A, L = 2, 4, 8          # batch, num_choices, seq len
    D, V = 32, 64              # embedding_dim, vocab size
    classifier_token = 5

    key = jax.random.PRNGKey(0)
    k_tok, k_wte, k_wpe, k_w, k_b = jax.random.split(key, 5)

    params = {
        "wte": 0.5 * jax.random.normal(k_wte, (V, D), dtype=jnp.float32),
        "wpe": 0.5 * jax.random.normal(k_wpe, (L, D), dtype=jnp.float32),
        "clf_w": 0.2 * jax.random.normal(k_w, (1, D), dtype=jnp.float32),
        "clf_b": 0.1 * jax.random.normal(k_b, (1,), dtype=jnp.float32),
    }
    # One-off init-time prep of the tied LM-head weight (bf16, vocab padded to
    # the tile grid) -> no per-forward cast/pad HBM round trip.
    params["wte_lm_head"] = prepare_lm_head_weight(params["wte"])

    idx = jax.random.randint(k_tok, (b, A, L), 0, V, dtype=jnp.int32)
    # Make sure each choice sequence contains the classifier token.
    idx = idx.at[:, :, -1].set(classifier_token)

    fwd = jax.jit(classifier_forward, static_argnums=(2,))
    lm_logits, clf_logits = jax.block_until_ready(
        fwd(idx, params, classifier_token))

    lm_ref, clf_ref = classifier_forward_ref(idx, params, classifier_token)

    assert lm_logits.shape == (b * A, L - 1, V)
    assert clf_logits.shape == (b, A)
    # LM-head matmul runs in bf16 on the MXU (f32 accumulation, bf16 output)
    # -> compare to the f32 reference with a bf16-appropriate tolerance.
    assert jnp.allclose(lm_logits.astype(jnp.float32), lm_ref,
                        atol=1e-1, rtol=5e-2)
    # Classifier path is f32 end-to-end.
    assert jnp.allclose(clf_logits, clf_ref, atol=1e-3, rtol=1e-3)

    print("KERNEL_OK")
</pallas_src>

<mosaic_0001>
module attributes {stable_mosaic.version = 11 : i64} {
  func.func @_lm_logits_kernel_single_k(%arg0: i32, %arg1: i32, %arg2: memref<64x32xbf16, #tpu.memory_space<vmem>>, %arg3: memref<64x32xbf16, #tpu.memory_space<vmem>>, %arg4: memref<64x64xbf16, #tpu.memory_space<vmem>>) attributes {dimension_semantics = [#tpu.dimension_semantics<parallel>, #tpu.dimension_semantics<parallel>], iteration_bounds = array<i64: 1, 1>, scalar_prefetch = 0 : i64, scratch_operands = 0 : i64, tpu.core_type = #tpu.core_type<tc>, window_params = [{transform_indices = @transform_0, window_bounds = array<i64: 64, 32>}, {transform_indices = @transform_1, window_bounds = array<i64: 64, 32>}, {transform_indices = @transform_2, window_bounds = array<i64: 64, 64>}]} {
    %c0 = arith.constant 0 : index
    %c0_0 = arith.constant 0 : index
    %0 = vector.load %arg2[%c0, %c0_0] : memref<64x32xbf16, #tpu.memory_space<vmem>>, vector<64x32xbf16>
    %c0_1 = arith.constant 0 : index
    %c0_2 = arith.constant 0 : index
    %1 = vector.load %arg3[%c0_1, %c0_2] : memref<64x32xbf16, #tpu.memory_space<vmem>>, vector<64x32xbf16>
    %cst = arith.constant dense<0.000000e+00> : vector<64x64xf32>
    %2 = tpu.matmul %0, %1, %cst {dimension_numbers = #tpu.dot_dimension_numbers<[1], [1], [0], [0], [0, 0, 1, 0], [], []>} : vector<64x32xbf16>, vector<64x32xbf16>, vector<64x64xf32> -> vector<64x64xf32>
    %3 = arith.truncf %2 : vector<64x64xf32> to vector<64x64xbf16>
    %c0_3 = arith.constant 0 : index
    %c0_4 = arith.constant 0 : index
    %4 = vector.load %arg4[%c0_3, %c0_4] : memref<64x64xbf16, #tpu.memory_space<vmem>>, vector<64x64xbf16>
    tpu.vector_store %arg4[%c0_3, %c0_4], %3 {strides = array<i32>} : memref<64x64xbf16, #tpu.memory_space<vmem>>, vector<64x64xbf16>,
    return
  }
  func.func @transform_0(%arg0: i32, %arg1: i32) -> (i32, i32) {
    %c0_i32 = arith.constant 0 : i32
    %c0_i32_0 = arith.constant 0 : i32
    return %arg0, %c0_i32 : i32, i32
  }
  func.func @transform_1(%arg0: i32, %arg1: i32) -> (i32, i32) {
    %c0_i32 = arith.constant 0 : i32
    %c0_i32_0 = arith.constant 0 : i32
    return %arg1, %c0_i32 : i32, i32
  }
  func.func @transform_2(%arg0: i32, %arg1: i32) -> (i32, i32) {
    %c0_i32 = arith.constant 0 : i32
    return %arg0, %arg1 : i32, i32
  }
}

module attributes {stable_mosaic.version = 11 : i64} {
  func.func @_clf_pool_linear_kernel(%arg0: i32, %arg1: memref<8xi32, #tpu.memory_space<smem>>, %arg2: memref<1x32xf32, #tpu.memory_space<vmem>>, %arg3: memref<1xf32, #tpu.memory_space<smem>>, %arg4: memref<64x32xf32, #tpu.memory_space<any>>, %arg5: memref<8x1xf32, #tpu.memory_space<vmem>>, %arg6: memref<8x32xf32, #tpu.memory_space<vmem>>, %arg7: memref<8x!tpu.dma_semaphore, #tpu.memory_space<semaphore_mem>>) attributes {dimension_semantics = [#tpu.dimension_semantics<arbitrary>], iteration_bounds = array<i64: 1>, scalar_prefetch = 1 : i64, scratch_operands = 2 : i64, tpu.core_type = #tpu.core_type<tc>, window_params = [{pipeline_mode = #tpu.pipeline_mode<synchronous>, transform_indices = @transform_0, window_bounds = array<i64: 1, 32>}, {transform_indices = @transform_1, window_bounds = array<i64: 1>}, {}, {pipeline_mode = #tpu.pipeline_mode<synchronous>, transform_indices = @transform_3, window_bounds = array<i64: 8, 1>}]} {
    %c0_i32 = arith.constant 0 : i32
    %c8_i32 = arith.constant 8 : i32
    %0 = arith.addi %c0_i32, %c8_i32 : i32
    %c1_i32 = arith.constant 1 : i32
    scf.for %arg8 = %c0_i32 to %0 step %c1_i32  : i32 {
      %c1_i32_11 = arith.constant 1 : i32
      %12 = arith.muli %arg8, %c1_i32_11 : i32
      %c0_i32_12 = arith.constant 0 : i32
      %13 = arith.addi %c0_i32_12, %12 : i32
      %14 = arith.index_cast %13 : i32 to index
      %15 = memref.load %arg1[%14] : memref<8xi32, #tpu.memory_space<smem>>
      %c0_i32_13 = arith.constant 0 : i32
      %16 = tpu.memref_slice %arg4[%15, %c0_i32_13] : memref<64x32xf32, #tpu.memory_space<any>> -> memref<1x32xf32, #tpu.memory_space<any>>
      %c0_i32_14 = arith.constant 0 : i32
      %17 = tpu.memref_slice %arg6[%13, %c0_i32_14] : memref<8x32xf32, #tpu.memory_space<vmem>> -> memref<1x32xf32, #tpu.memory_space<vmem>>
      %18 = tpu.memref_slice %arg7[%13] : memref<8x!tpu.dma_semaphore, #tpu.memory_space<semaphore_mem>> -> memref<1x!tpu.dma_semaphore, #tpu.memory_space<semaphore_mem>>
      %19 = tpu.memref_squeeze %18 : memref<1x!tpu.dma_semaphore, #tpu.memory_space<semaphore_mem>> -> memref<!tpu.dma_semaphore, #tpu.memory_space<semaphore_mem>>
      tpu.enqueue_dma source(%16 : memref<1x32xf32, #tpu.memory_space<any>>) target(%17 : memref<1x32xf32, #tpu.memory_space<vmem>>) target_semaphore(%19 : memref<!tpu.dma_semaphore, #tpu.memory_space<semaphore_mem>>)
    }
    %c8_i32_0 = arith.constant 8 : i32
    %c0_i32_1 = arith.constant 0 : i32
    %c8_i32_2 = arith.constant 8 : i32
    %1 = arith.addi %c0_i32_1, %c8_i32_2 : i32
    %c1_i32_3 = arith.constant 1 : i32
    scf.for %arg8 = %c0_i32_1 to %1 step %c1_i32_3  : i32 {
      %c1_i32_11 = arith.constant 1 : i32
      %12 = arith.muli %arg8, %c1_i32_11 : i32
      %c0_i32_12 = arith.constant 0 : i32
      %13 = arith.addi %c0_i32_12, %12 : i32
      %c0_i32_13 = arith.constant 0 : i32
      %c0_i32_14 = arith.constant 0 : i32
      %14 = tpu.memref_slice %arg4[%c0_i32_13, %c0_i32_14] : memref<64x32xf32, #tpu.memory_space<any>> -> memref<1x32xf32, #tpu.memory_space<any>>
      %c0_i32_15 = arith.constant 0 : i32
      %15 = tpu.memref_slice %arg6[%13, %c0_i32_15] : memref<8x32xf32, #tpu.memory_space<vmem>> -> memref<1x32xf32, #tpu.memory_space<vmem>>
      %16 = tpu.memref_slice %arg7[%13] : memref<8x!tpu.dma_semaphore, #tpu.memory_space<semaphore_mem>> -> memref<1x!tpu.dma_semaphore, #tpu.memory_space<semaphore_mem>>
      %17 = tpu.memref_squeeze %16 : memref<1x!tpu.dma_semaphore, #tpu.memory_space<semaphore_mem>> -> memref<!tpu.dma_semaphore, #tpu.memory_space<semaphore_mem>>
      tpu.wait_dma2 semaphore(%17 : memref<!tpu.dma_semaphore, #tpu.memory_space<semaphore_mem>>) src(%14 : memref<1x32xf32, #tpu.memory_space<any>>) dst(%15 : memref<1x32xf32, #tpu.memory_space<vmem>>)
    }
    %c8_i32_4 = arith.constant 8 : i32
    %c0 = arith.constant 0 : index
    %c0_5 = arith.constant 0 : index
    %2 = vector.load %arg6[%c0, %c0_5] : memref<8x32xf32, #tpu.memory_space<vmem>>, vector<8x32xf32>
    %c0_6 = arith.constant 0 : index
    %c0_7 = arith.constant 0 : index
    %3 = vector.load %arg2[%c0_6, %c0_7] : memref<1x32xf32, #tpu.memory_space<vmem>>, vector<1x32xf32>
    %4 = vector.broadcast %3 : vector<1x32xf32> to vector<8x32xf32>
    %5 = arith.mulf %2, %4 : vector<8x32xf32>
    %cst = arith.constant dense<0.000000e+00> : vector<8xf32>
    %6 = vector.multi_reduction <add>, %5, %cst [1] : vector<8x32xf32> to vector<8xf32>
    %7 = vector.shape_cast %6 : vector<8xf32> to vector<8x1xf32>
    %c0_8 = arith.constant 0 : index
    %8 = memref.load %arg3[%c0_8] : memref<1xf32, #tpu.memory_space<smem>>
    %9 = vector.broadcast %8 : f32 to vector<8x1xf32>
    %10 = arith.addf %7, %9 : vector<8x1xf32>
    %c0_9 = arith.constant 0 : index
    %c0_10 = arith.constant 0 : index
    %11 = vector.load %arg5[%c0_9, %c0_10] : memref<8x1xf32, #tpu.memory_space<vmem>>, vector<8x1xf32>
    tpu.vector_store %arg5[%c0_9, %c0_10], %10 {strides = array<i32>} : memref<8x1xf32, #tpu.memory_space<vmem>>, vector<8x1xf32>,
    return
  }
  func.func @transform_0(%arg0: i32, %arg1: memref<8xi32, #tpu.memory_space<smem>>) -> (i32, i32) {
    %c0_i32 = arith.constant 0 : i32
    %c0_i32_0 = arith.constant 0 : i32
    %c0_i32_1 = arith.constant 0 : i32
    return %c0_i32, %c0_i32_0 : i32, i32
  }
  func.func @transform_1(%arg0: i32, %arg1: memref<8xi32, #tpu.memory_space<smem>>) -> i32 {
    %c0_i32 = arith.constant 0 : i32
    %c0_i32_0 = arith.constant 0 : i32
    return %c0_i32 : i32
  }
  func.func @transform_3(%arg0: i32, %arg1: memref<8xi32, #tpu.memory_space<smem>>) -> (i32, i32) {
    %c0_i32 = arith.constant 0 : i32
    %c0_i32_0 = arith.constant 0 : i32
    %c0_i32_1 = arith.constant 0 : i32
    return %c0_i32, %c0_i32_0 : i32, i32
  }
}

</mosaic_0001>

<llo_original>
// kernel: squeeze.1
$region0: #{squeeze.1}
  %s0 = inlined_call_operand.vmem [shape: f32[8], index: 0, kind: input, shape index: {}]
  %s1 = inlined_call_operand.hbm [shape: f32[2,4], index: 1, kind: output, shape index: {}]
  $region1: #{squeeze.1} parent=0
    #allocation0 [shape = 'u8[1024]{0}', space=vmem, size = 0x400, scoped, tag = 'operand span for operand 1']
    #allocation1 [shape = 's32[1]{0}', space=sflag, size = 0x4, scoped, tag = 'scoped memory for squeeze.1']
    #allocation2 [shape = 'u8[4096]{0}', space=vmem, size = 0x1000, scoped, tag = 'scoped mem for output reshape']
    #allocation3 [shape = 'u8[4096]{0}', space=vmem, size = 0x1000, scoped, tag = 'scoped mem for input reshape']
    %2 = vsyncpa [#allocation1], 0
    %s4 = sshll.u32 1, 1
    %s5 = ssub.s32 %s4, 1
    %v6 = vld [vmem:[%s0] sm:%s5]
    %7 = vst [vmem:[#allocation3] sm:%s5] %v6
    %v8 = vld [vmem:[#allocation3] sm:$0x1]
    %vm9 = vcmask 31744
    %10 = vst.msk [vmem:[#allocation2] sm:$0x1] %vm9, %v8
    %v11 = vld [vmem:[#allocation3] sm:$0x1]
    %12 = vrot.lane.b32.xlu0 %v11, 124
    %v13 = vpop.permute.xlu0 %12
    %vm14 = vcmask 31744
    %s15 = scalar_lea.vmem [#allocation2], 1
    %16 = vst.msk [vmem:[%s15] sm:$0x1] %vm14, %v13
    %s18 = sshll.u32 1, 2
    %s19 = ssub.s32 %s18, 1
    %v21 = vld [vmem:[#allocation2] sm:%s19]
    %s22 = sshll.u32 1, 2
    %s23 = ssub.s32 %s22, 1
    %24 = vst [vmem:[#allocation0] sm:%s23] %v21
    %s26 = ssub.s32 32, 32
    %27 = vsyncadd [#allocation1], %s26
    %s29 = sshll.u32 [#allocation0], 4
    %s30 = int_to_ptr.vmem [resolvable:$true] %s29
    %32 = dma.vmem_to_hbm [thread:$0]  %s30, 32, %s1, [#allocation1]
    %33 = dma.done [#allocation1], 32
    %34 = vsyncpa [#allocation1], 1

// kernel: classifier_forward.3
$region0: #{classifier_forward.3}
  #allocation0 [shape = 'u32[]', space=smem, size = 0x4, offset = 0x4, fixed_abs, tag = 'smem constant byte address 0x4 - core index']
  #allocation1 [shape = 'u32[144,128]{1,0:T(1,128)}', space=vmem, size = 0x12000, scoped, tag = 'internal scratch']
  #allocation2 [shape = 'f32[8,32]{1,0:T(8,128)}', space=vmem, size = 0x1000, scoped, tag = 'scratch operand']
  #allocation3 [shape = 's32[8]{0}', space=sflag, size = 0x20, scoped, tag = 'scratch operand']
  #allocation4 [shape = 's32[1]{0}', space=sflag, size = 0x4, scoped, tag = 'scoped memory for classifier_forward.3']
  #allocation5 [shape = 'u8[512]{0}', space=smem, size = 0x200, scoped, tag = 'prefetched SMEM operand 0']
  #allocation6 [shape = 'f32[1]{0:T(128)S(6)}', space=smem, size = 0x200, scoped, tag = 'scoped memory for classifier_forward.3']
  #allocation7 [shape = 's32[]', space=sflag, size = 0x4, offset = 0, fixed_abs, tag = 'sflag constant byte address 0x0 - dummy sync flag']
  %s0 = inlined_call_operand.vmem [shape: s32[8], index: 0, kind: input, shape index: {}]
  %s1 = inlined_call_operand.vmem [shape: f32[1,32], index: 1, kind: input, shape index: {}]
  %s2 = inlined_call_operand.<no memory space> [shape: f32[1], index: 2, kind: input, shape index: {}]
  %s3 = inlined_call_operand.vmem [shape: f32[64,32], index: 3, kind: input, shape index: {}]
  %s4 = inlined_call_operand.vmem [shape: f32[8,1], index: 4, kind: output, shape index: {}]
  %s5 = sld [smem:[#allocation0]]
  $region62: #{classifier_forward.3} parent=0
    _
  %s7 = ssub.s32 1, %s5
  %s8 = scalar_select 0, %s7, %s5
  %s9 = sshll.u32 %s0, 4
  %s10 = int_to_ptr.vmem [resolvable:$true] %s9
  %12 = dma.vmem_to_smem %s10, 16, [#allocation5], [#allocation4]
  %13 = sst [smem:[#allocation6]] %s2
  %14 = dma.done [#allocation4], 16
  %15 = sfence
  // Predicated region
  $region2: #{classifier_forward.3} parent=0 // pred_check
    _
  $region3: #{classifier_forward.3} parent=0 // pred_check_branch
    %17 = sbr.rel (0) target = $region5
  $region4: #{classifier_forward.3} parent=0 // pred_region
    _
  $region5: #{classifier_forward.3} parent=0 // pred_fallthru
    _
  // Predicated region
  $region6: #{classifier_forward.3} parent=0 // pred_check
    _
  $region7: #{classifier_forward.3} parent=0 // pred_check_branch
    %19 = sbr.rel (0) target = $region9
  $region8: #{classifier_forward.3} parent=0 // pred_region
    _
  $region9: #{classifier_forward.3} parent=0 // pred_fallthru
    _
  loop: start=0, step=1, limit=8
  $region10: #{classifier_forward.3} parent=0 // loop_pre_header
    _
  $region11: #{classifier_forward.3} parent=0 // loop_header
    %s21 = sphi 0, %s25
    %p22 = scmp.ge.s32.totalorder %s21, 8
  $region12: #{classifier_forward.3} parent=0 // loop_header_branch
    %24 = sbr.rel (%p22) target = $region16
  $region13: #{classifier_forward.3} parent=0 // loop_body
    %s26 = sld [smem:[#allocation5 + %s21]]
    %s27 = scalar_lea.vmem %s3, %s26
    %s28 = scalar_lea.vmem [#allocation2], %s21
    %s29 = scalar_lea.sflag [#allocation3], %s21
    %p31 = scmp.lt.u32.totalorder 1, 8
    %p32 = pneg %p31
    // Predicated region
    $region17: #{classifier_forward.3} parent=13 // pred_check
      _
    $region18: #{classifier_forward.3} parent=13 // pred_check_branch
      %34 = sbr.rel (%p31) target = $region20
    $region19: #{classifier_forward.3} parent=13 // pred_region
      %s50 = sand.u32 1, 7
      %p51 = scmp.eq.s32.totalorder %s50, 0
      %p52 = pneg %p51
      // Predicated region
      $region32: #{classifier_forward.3} parent=19 // pred_check
        _
      $region33: #{classifier_forward.3} parent=19 // pred_check_branch
        %54 = sbr.rel (%p51) target = $region35
      $region34: #{classifier_forward.3} parent=19 // pred_region
        %s55 = sand.u32 1, 7
        %s56 = ssub.s32 1, %s55
        %s57 = scalar_lea.vmem %s27, %s56
        %s58 = ssub.s32 1, %s55
        %s59 = scalar_lea.vmem %s28, %s58 [#allocation2]
        %s60 = sshll.u32 1, %s55
        %s61 = ssub.s32 %s60, 1
        loop: start=0, step=1, limit=1
        $region36: #{classifier_forward.3} parent=34 // loop_pre_header
          _
        $region37: #{classifier_forward.3} parent=34 // loop_header
          %s63 = sphi 0, %s67
          %p64 = scmp.ge.s32.totalorder %s63, 1
          %s68 = sphi %s57, %s57
          %s69 = sphi %s59, %s59
        $region38: #{classifier_forward.3} parent=34 // loop_header_branch
          %66 = sbr.rel (%p64) target = $region42
        $region39: #{classifier_forward.3} parent=34 // loop_body
          %v70 = vld [vmem:[%s68] sm:%s61]
          %71 = vst [vmem:[%s69] sm:%s61] %v70
        $region40: #{classifier_forward.3} parent=34 // loop_footer
          %s67 = sadd.s32 1, %s63
        $region41: #{classifier_forward.3} parent=34 // loop_footer_branch
          %62 = sbr.rel target = $region37
        $region42: #{classifier_forward.3} parent=34 // loop_exit
          _
      $region35: #{classifier_forward.3} parent=19 // pred_fallthru
        _
    $region20: #{classifier_forward.3} parent=13 // pred_fallthru
      _
    // Predicated region
    $region21: #{classifier_forward.3} parent=13 // pred_check
      %p35 = pneg %p31
    $region22: #{classifier_forward.3} parent=13 // pred_check_branch
      %37 = sbr.rel (%p35) target = $region24
    $region23: #{classifier_forward.3} parent=13 // pred_region
      %s38 = sshll.u32 1, 1
      %s39 = ssub.s32 %s38, 1
      loop: start=0, step=1, limit=1
      $region25: #{classifier_forward.3} parent=23 // loop_pre_header
        _
      $region26: #{classifier_forward.3} parent=23 // loop_header
        %s41 = sphi 0, %s45
        %p42 = scmp.ge.s32.totalorder %s41, 1
        %s46 = sphi %s27, %s27
        %s47 = sphi %s28, %s28
      $region27: #{classifier_forward.3} parent=23 // loop_header_branch
        %44 = sbr.rel (%p42) target = $region31
      $region28: #{classifier_forward.3} parent=23 // loop_body
        %v48 = vld [vmem:[%s46] sm:%s39]
        %49 = vst [vmem:[%s47] sm:%s39] %v48
      $region29: #{classifier_forward.3} parent=23 // loop_footer
        %s45 = sadd.s32 1, %s41
      $region30: #{classifier_forward.3} parent=23 // loop_footer_branch
        %40 = sbr.rel target = $region26
      $region31: #{classifier_forward.3} parent=23 // loop_exit
        _
    $region24: #{classifier_forward.3} parent=13 // pred_fallthru
      _
    // Predicated region
    $region43: #{classifier_forward.3} parent=13 // pred_check
      _
    $region44: #{classifier_forward.3} parent=13 // pred_check_branch
      %74 = sbr.rel (0) target = $region46
    $region45: #{classifier_forward.3} parent=13 // pred_region
      %75 = vsyncadd %s29, 16
    $region46: #{classifier_forward.3} parent=13 // pred_fallthru
      _
  $region14: #{classifier_forward.3} parent=0 // loop_footer
    %s25 = sadd.s32 1, %s21
  $region15: #{classifier_forward.3} parent=0 // loop_footer_branch
    %20 = sbr.rel target = $region11
  $region16: #{classifier_forward.3} parent=0 // loop_exit
    _
  loop: start=0, step=1, limit=8
  $region47: #{classifier_forward.3} parent=0 // loop_pre_header
    _
  $region48: #{classifier_forward.3} parent=0 // loop_header
    %s77 = sphi 0, %s81
    %p78 = scmp.ge.s32.totalorder %s77, 8
  $region49: #{classifier_forward.3} parent=0 // loop_header_branch
    %80 = sbr.rel (%p78) target = $region53
  $region50: #{classifier_forward.3} parent=0 // loop_body
    %s82 = scalar_lea.sflag [#allocation3], %s77
    %s83 = smul.u32 1, 1
    %s84 = sshll.u32 %s83, 4
    %85 = dma.done %s82, %s84
  $region51: #{classifier_forward.3} parent=0 // loop_footer
    %s81 = sadd.s32 1, %s77
  $region52: #{classifier_forward.3} parent=0 // loop_footer_branch
    %76 = sbr.rel target = $region48
  $region53: #{classifier_forward.3} parent=0 // loop_exit
    _
  %v86 = vld [vmem:[#allocation2] sm:$0xff]
  %v87 = vld [vmem:[%s1] sm:$0x1]
  %v89 = vlaneseq
  %v90 = vshrl.u32 %v89, 7
  %v91 = vsub.s32 0, %v90
  %v92 = vrot.slane %v87, %v91
  %v94 = vmul.f32 %v86, %v92
  %vm95 = vcmask 261120
  %v96 = vsel %vm95, %v94, 0.0
  %97 = vadd.xlane.f32.xlu0 %v96
  %v98 = vpop.xlane.xlu0 %97
  %s99 = sld [smem:[#allocation6]]
  %v100 = vstv %s99
  %v101 = vadd.f32 %v98, %v100
  %vm102 = vcmask 7168
  %103 = vst.msk [vmem:[%s4] sm:$0xff] %vm102, %v101
  // Predicated region
  $region54: #{classifier_forward.3} parent=0 // pred_check
    _
  $region55: #{classifier_forward.3} parent=0 // pred_check_branch
    %105 = sbr.rel (0) target = $region57
  $region56: #{classifier_forward.3} parent=0 // pred_region
    _
  $region57: #{classifier_forward.3} parent=0 // pred_fallthru
    _
  // Predicated region
  $region58: #{classifier_forward.3} parent=0 // pred_check
    _
  $region59: #{classifier_forward.3} parent=0 // pred_check_branch
    %107 = sbr.rel (0) target = $region61
  $region60: #{classifier_forward.3} parent=0 // pred_region
    _
  $region61: #{classifier_forward.3} parent=0 // pred_fallthru
    _
  %108 = vsyncmov [#allocation3]
  %s109 = vpop.sfrf %108
  %p110 = scmp.eq.s32.totalorder %s109, 0
  %p111 = pneg %p110
  %113 = shalt.err (%p111)
  %s114 = scalar_lea.sflag [#allocation3], 1
  %115 = vsyncmov %s114
  %s116 = vpop.sfrf %115
  %p117 = scmp.eq.s32.totalorder %s116, 0
  %p118 = pneg %p117
  %120 = shalt.err (%p118)
  %s121 = scalar_lea.sflag [#allocation3], 2
  %122 = vsyncmov %s121
  %s123 = vpop.sfrf %122
  %p124 = scmp.eq.s32.totalorder %s123, 0
  %p125 = pneg %p124
  %127 = shalt.err (%p125)
  %s128 = scalar_lea.sflag [#allocation3], 3
  %129 = vsyncmov %s128
  %s130 = vpop.sfrf %129
  %p131 = scmp.eq.s32.totalorder %s130, 0
  %p132 = pneg %p131
  %134 = shalt.err (%p132)
  %s135 = scalar_lea.sflag [#allocation3], 4
  %136 = vsyncmov %s135
  %s137 = vpop.sfrf %136
  %p138 = scmp.eq.s32.totalorder %s137, 0
  %p139 = pneg %p138
  %141 = shalt.err (%p139)
  %s142 = scalar_lea.sflag [#allocation3], 5
  %143 = vsyncmov %s142
  %s144 = vpop.sfrf %143
  %p145 = scmp.eq.s32.totalorder %s144, 0
  %p146 = pneg %p145
  %148 = shalt.err (%p146)
  %s149 = scalar_lea.sflag [#allocation3], 6
  %150 = vsyncmov %s149
  %s151 = vpop.sfrf %150
  %p152 = scmp.eq.s32.totalorder %s151, 0
  %p153 = pneg %p152
  %155 = shalt.err (%p153)
  %s156 = scalar_lea.sflag [#allocation3], 7
  %157 = vsyncmov %s156
  %s158 = vpop.sfrf %157
  %p159 = scmp.eq.s32.totalorder %s158, 0
  %p160 = pneg %p159
  %162 = shalt.err (%p160)

// kernel: classifier_forward.2
$region0: #{classifier_forward.2}
  #allocation0 [shape = 'u32[]', space=smem, size = 0x4, offset = 0x4, fixed_abs, tag = 'smem constant byte address 0x4 - core index']
  #allocation1 [shape = 'u32[144,128]{1,0:T(1,128)}', space=vmem, size = 0x12000, scoped, tag = 'internal scratch']
  %s0 = inlined_call_operand.vmem [shape: bf16[64,32], index: 0, kind: input, shape index: {}]
  %s1 = inlined_call_operand.vmem [shape: bf16[64,32], index: 1, kind: input, shape index: {}]
  %s2 = inlined_call_operand.vmem [shape: bf16[64,64], index: 2, kind: output, shape index: {}]
  %s3 = sld [smem:[#allocation0]]
  $region18: #{classifier_forward.2} parent=0
    _
  %s5 = ssub.s32 1, %s3
  %s6 = scalar_select 0, %s5, %s3
  // Predicated region
  $region2: #{classifier_forward.2} parent=0 // pred_check
    _
  $region3: #{classifier_forward.2} parent=0 // pred_check_branch
    %8 = sbr.rel (0) target = $region5
  $region4: #{classifier_forward.2} parent=0 // pred_region
    _
  $region5: #{classifier_forward.2} parent=0 // pred_fallthru
    _
  // Predicated region
  $region6: #{classifier_forward.2} parent=0 // pred_check
    _
  $region7: #{classifier_forward.2} parent=0 // pred_check_branch
    %10 = sbr.rel (0) target = $region9
  $region8: #{classifier_forward.2} parent=0 // pred_region
    _
  $region9: #{classifier_forward.2} parent=0 // pred_fallthru
    _
  %v12 = vld [vmem:[%s0] sm:$0xf]
  %v13 = vld [vmem:[%s0 + $0x4] sm:$0xf]
  %v14 = vld [vmem:[%s0 + $0x8] sm:$0xf]
  %v15 = vld [vmem:[%s0 + $0xc] sm:$0xf]
  %v16 = vld [vmem:[%s0 + $0x10] sm:$0xf]
  %v17 = vld [vmem:[%s0 + $0x14] sm:$0xf]
  %v18 = vld [vmem:[%s0 + $0x18] sm:$0xf]
  %v19 = vld [vmem:[%s0 + $0x1c] sm:$0xf]
  %v20 = vld [vmem:[%s1] sm:$0xf]
  %v21 = vld [vmem:[%s1 + $0x4] sm:$0xf]
  %v22 = vld [vmem:[%s1 + $0x8] sm:$0xf]
  %v23 = vld [vmem:[%s1 + $0xc] sm:$0xf]
  %v24 = vld [vmem:[%s1 + $0x10] sm:$0xf]
  %v25 = vld [vmem:[%s1 + $0x14] sm:$0xf]
  %v26 = vld [vmem:[%s1 + $0x18] sm:$0xf]
  %v27 = vld [vmem:[%s1 + $0x1c] sm:$0xf]
  %v36 = vunpack.c.l.b16 %v12
  %v37 = vunpack.c.l.b16 %v13
  %v38 = vunpack.c.l.b16 %v14
  %v39 = vunpack.c.l.b16 %v15
  %v40 = vunpack.c.l.b16 %v16
  %v41 = vunpack.c.l.b16 %v17
  %v42 = vunpack.c.l.b16 %v18
  %v43 = vunpack.c.l.b16 %v19
  %v44 = vpack.c.b16 %v37, %v36
  %v45 = vpack.c.b16 %v39, %v38
  %v46 = vpack.c.b16 %v41, %v40
  %v47 = vpack.c.b16 %v43, %v42
  %v56 = vunpack.c.l.b16 %v20
  %v57 = vunpack.c.l.b16 %v21
  %v58 = vunpack.c.l.b16 %v22
  %v59 = vunpack.c.l.b16 %v23
  %v60 = vunpack.c.l.b16 %v24
  %v61 = vunpack.c.l.b16 %v25
  %v62 = vunpack.c.l.b16 %v26
  %v63 = vunpack.c.l.b16 %v27
  %v64 = vpack.c.b16 %v57, %v56
  %v65 = vpack.c.b16 %v59, %v58
  %v66 = vpack.c.b16 %v61, %v60
  %v67 = vpack.c.b16 %v63, %v62
  %vm68 = vcmask 261120
  %v70 = vsel %vm68, %v44, 0
  %v73 = vsel %vm68, %v45, 0
  %v76 = vsel %vm68, %v46, 0
  %v79 = vsel %vm68, %v47, 0
  %v82 = vsel %vm68, %v64, 0
  %v85 = vsel %vm68, %v65, 0
  %v88 = vsel %vm68, %v66, 0
  %v91 = vsel %vm68, %v67, 0
  %93 = vmatprep.subr.bf16.mxu0 0
  %94 = vmatpush1.bf16.xpose.msra.mxu0 0
  %95 = vmatprep.subr.bf16.mxu0 0
  %96 = vmatpush1.bf16.xpose.msra.mxu0 0
  %97 = vmatprep.subr.bf16.mxu0 0
  %98 = vmatpush1.bf16.xpose.msra.mxu0 0
  %99 = vmatprep.subr.bf16.mxu0 0
  %100 = vmatpush1.bf16.xpose.msra.mxu0 0
  %101 = vmatprep.subr.bf16.mxu0 0
  %102 = vmatpush1.bf16.xpose.msra.mxu0 %v91
  %103 = vmatprep.subr.bf16.mxu0 0
  %104 = vmatpush1.bf16.xpose.msra.mxu0 %v88
  %105 = vmatprep.subr.bf16.mxu0 0
  %106 = vmatpush1.bf16.xpose.msra.mxu0 %v85
  %107 = vmatprep.subr.bf16.mxu0 0
  %108 = vmatpush1.bf16.xpose.msra.mxu0 %v82
  %109 = vmatprep.subr.bf16.mxu0 0
  %110 = vmatpush2.bf16.xpose.msra.mxu0 0
  %111 = vmatprep.subr.bf16.mxu0 0
  %112 = vmatpush2.bf16.xpose.msra.mxu0 0
  %113 = vmatprep.subr.bf16.mxu0 0
  %114 = vmatpush2.bf16.xpose.msra.mxu0 0
  %115 = vmatprep.subr.bf16.mxu0 0
  %116 = vmatpush2.bf16.xpose.msra.mxu0 0
  %117 = vmatprep.subr.bf16.mxu0 0
  %118 = vmatpush2.bf16.xpose.msra.mxu0 0
  %119 = vmatprep.subr.bf16.mxu0 0
  %120 = vmatpush2.bf16.xpose.msra.mxu0 0
  %121 = vmatprep.subr.bf16.mxu0 0
  %122 = vmatpush2.bf16.xpose.msra.mxu0 0
  %123 = vmatprep.subr.bf16.mxu0 0
  %124 = vmatpush2.bf16.xpose.msra.mxu0 0
  %125 = vmatprep.mubr.bf16.mxu0 0
  %126 = vmatmul.mubr.bf16.gmra.mxu0 %v70
  %v127 = vpop.f32.mrf.mxu0
  %v128 = vadd.f32 0.0, %v127
  %v129 = vpop.f32.mrf.mxu0
  %v130 = vpop.f32.mrf.mxu0
  %v131 = vadd.f32 0.0, %v130
  %v132 = vpop.f32.mrf.mxu0
  %133 = vmatprep.mubr.bf16.mxu0 0
  %134 = vmatmul.mubr.bf16.gmra.mxu0 %v73
  %v135 = vpop.f32.mrf.mxu0
  %v136 = vadd.f32 0.0, %v135
  %v137 = vpop.f32.mrf.mxu0
  %v138 = vpop.f32.mrf.mxu0
  %v139 = vadd.f32 0.0, %v138
  %v140 = vpop.f32.mrf.mxu0
  %141 = vmatprep.mubr.bf16.mxu0 0
  %142 = vmatmul.mubr.bf16.gmra.mxu0 %v76
  %v143 = vpop.f32.mrf.mxu0
  %v144 = vadd.f32 0.0, %v143
  %v145 = vpop.f32.mrf.mxu0
  %v146 = vpop.f32.mrf.mxu0
  %v147 = vadd.f32 0.0, %v146
  %v148 = vpop.f32.mrf.mxu0
  %149 = vmatprep.mubr.bf16.mxu0 0
  %150 = vmatmul.mubr.bf16.gmra.mxu0 %v79
  %v151 = vpop.f32.mrf.mxu0
  %v152 = vadd.f32 0.0, %v151
  %v153 = vpop.f32.mrf.mxu0
  %v154 = vpop.f32.mrf.mxu0
  %v155 = vadd.f32 0.0, %v154
  %v156 = vpop.f32.mrf.mxu0
  %157 = vdwg.mxu0
  %v158 = vpack.c.bf16 %v131, %v128
  %v159 = vpack.c.bf16 %v139, %v136
  %v160 = vpack.c.bf16 %v147, %v144
  %v161 = vpack.c.bf16 %v155, %v152
  %v166 = vunpack.c.l.b16 %v158
  %v167 = vunpack.c.h.b16 %v158
  %v168 = vunpack.c.l.b16 %v159
  %v169 = vunpack.c.h.b16 %v159
  %v170 = vunpack.c.l.b16 %v160
  %v171 = vunpack.c.h.b16 %v160
  %v172 = vunpack.c.l.b16 %v161
  %v173 = vunpack.c.h.b16 %v161
  %v174 = vpack.c.b16 %v166, %v166
  %v175 = vpack.c.b16 %v167, %v167
  %v176 = vpack.c.b16 %v168, %v168
  %v177 = vpack.c.b16 %v169, %v169
  %v178 = vpack.c.b16 %v170, %v170
  %v179 = vpack.c.b16 %v171, %v171
  %v180 = vpack.c.b16 %v172, %v172
  %v181 = vpack.c.b16 %v173, %v173
  %vm190 = vcmask 519168
  %191 = vst.msk [vmem:[%s2] sm:$0xf] %vm190, %v174
  %192 = vst.msk [vmem:[%s2 + $0x4] sm:$0xf] %vm190, %v175
  %193 = vst.msk [vmem:[%s2 + $0x8] sm:$0xf] %vm190, %v176
  %194 = vst.msk [vmem:[%s2 + $0xc] sm:$0xf] %vm190, %v177
  %195 = vst.msk [vmem:[%s2 + $0x10] sm:$0xf] %vm190, %v178
  %196 = vst.msk [vmem:[%s2 + $0x14] sm:$0xf] %vm190, %v179
  %197 = vst.msk [vmem:[%s2 + $0x18] sm:$0xf] %vm190, %v180
  %198 = vst.msk [vmem:[%s2 + $0x1c] sm:$0xf] %vm190, %v181
  // Predicated region
  $region10: #{classifier_forward.2} parent=0 // pred_check
    _
  $region11: #{classifier_forward.2} parent=0 // pred_check_branch
    %200 = sbr.rel (0) target = $region13
  $region12: #{classifier_forward.2} parent=0 // pred_region
    _
  $region13: #{classifier_forward.2} parent=0 // pred_fallthru
    _
  // Predicated region
  $region14: #{classifier_forward.2} parent=0 // pred_check
    _
  $region15: #{classifier_forward.2} parent=0 // pred_check_branch
    %202 = sbr.rel (0) target = $region17
  $region16: #{classifier_forward.2} parent=0 // pred_region
    _
  $region17: #{classifier_forward.2} parent=0 // pred_fallthru
    _

</llo_original>
